<compile_context>
chip_gen: v6e
topology: v6e:2x2x1
jax: 0.10.0
libtpu: 0.0.40
codegen_flags: <defaults>
</compile_context>

<pallas_src>
import numpy as np
import jax
import jax.numpy as jnp
from jax import lax
from jax.experimental import pallas as pl
from jax.experimental.pallas import tpu as pltpu


def _cdiv(a, b):
    return -(-a // b)


def _round_up(a, b):
    return _cdiv(a, b) * b


def _make_cbce_kernel(n_rows, tile_n):
    def kernel(x_ref, t_ref, w_ref, lsum_ref, wsum_ref):
        i = pl.program_id(0)

        @pl.when(i == 0)
        def _():
            lsum_ref[...] = jnp.zeros_like(lsum_ref)
            wsum_ref[...] = jnp.zeros_like(wsum_ref)

        x = x_ref[...].astype(jnp.float32)      # (TN, C)
        t = t_ref[...]                          # (TN, 1) int32
        w = w_ref[...]                          # (1, C)  f32
        tn, c = x.shape

        # Ragged-tail mask: rows >= n_rows come from the undefined padding of
        # the last partial block.  Zero the logits BEFORE max/exp (so NaN/Inf
        # garbage can't leak) and zero the per-row weight.
        row = lax.broadcasted_iota(jnp.int32, (tn, 1), 0) + i * tile_n   # (TN,1)
        valid = row < n_rows

        x = jnp.where(valid, x, 0.0)

        # Numerically stable log-sum-exp per row.
        m = jnp.max(x, axis=-1, keepdims=True)                               # (TN,1)
        lse = jnp.log(jnp.sum(jnp.exp(x - m), axis=-1, keepdims=True)) + m   # (TN,1)

        # One-hot target mask, reused for both the logit and the weight gather.
        # NOTE: assumes 0 <= target < C (torch CrossEntropyLoss w/o ignore_index).
        cls = lax.broadcasted_iota(jnp.int32, (1, c), 1)                     # (1,C)
        hit = cls == t                                                        # (TN,C)

        x_t = jnp.sum(jnp.where(hit, x, 0.0), axis=-1, keepdims=True)        # (TN,1)
        w_t = jnp.sum(jnp.where(hit, w, 0.0), axis=-1, keepdims=True)        # (TN,1)
        w_t = jnp.where(valid, w_t, 0.0)

        nll = lse - x_t                                                       # (TN,1)

        # TODO(synk): fold w_t*nll and w_t into one (TN,2) reduce (or a
        # lane-resident accumulator collapsed once at the end) to shave the
        # second cross-sublane reduce per step.
        lsum_ref[...] += jnp.sum(w_t * nll, axis=(0, 1), keepdims=True)       # (1,1)
        wsum_ref[...] += jnp.sum(w_t, axis=(0, 1), keepdims=True)             # (1,1)

    return kernel


def cbce_loss(x, target, weight, *, tile_n=None):
    """x: (N, C) logits (f32 or bf16), target: (N,) ints, weight: (C,) f32."""
    n, c = x.shape
    itemsize = jnp.dtype(x.dtype).itemsize

    t2d = target.astype(jnp.int32).reshape(n, 1)
    w2d = weight.astype(jnp.float32).reshape(1, c)

    # ---- VMEM-budgeted row tile (lane-padding aware) ----------------------
    # Mosaic lane-pads the minor dim of every VMEM block to 128, so size tiles
    # against round_up(C, 128).  Per-row budget: double-buffered logits block
    # (input dtype) + ~4 f32 intermediates of the same padded width + the
    # double-buffered, 128-lane-padded (TN,1) int32 target block.
    c_pad = _round_up(c, 128)
    per_row = 2 * c_pad * itemsize + 4 * c_pad * 4 + 2 * 128 * 4
    buf_budget = 12 * 1024 * 1024          # keeps each logits buffer at ~1.5-2 MiB
    max_rows = max(8, (buf_budget // per_row) // 8 * 8)
    if tile_n is None:
        tile_n = min(_round_up(n, 8), max_rows)
    tile_n = max(8, (tile_n // 8) * 8)
    n_tiles = _cdiv(n, tile_n)

    # Explicit scoped-VMEM limit.  Stays <= 16 MiB (the v5e default) for any C
    # the single-pass layout is intended for; only the minimum 8-row tile on a
    # huge class count pushes past it (see online-LSE TODO below).
    need = tile_n * per_row + 2 * 8 * c_pad * 4 + (2 << 20)
    vmem_limit = int(min(max(need, 4 << 20), 48 << 20))

    # TODO(synk): lane-dense layout for C <= 64 (fold 128/C rows into the lane
    # axis with segmented reductions) to recover the idle 128-C lanes.
    # TODO(synk): online (flash-style) LSE over a class-chunk grid axis so very
    # large C (>~64k) doesn't need a full (tile_n, C) row block in VMEM.
    # TODO(synk): 2-way CORE_PARALLEL row-tile split to use both v7x TensorCores.

    out_shape = jax.ShapeDtypeStruct((1, 1), jnp.float32)
    lsum, wsum = pl.pallas_call(
        _make_cbce_kernel(n, tile_n),
        out_shape=(out_shape, out_shape),
        grid_spec=pltpu.PrefetchScalarGridSpec(
            num_scalar_prefetch=0,
            grid=(n_tiles,),
            in_specs=[
                pl.BlockSpec((tile_n, c), lambda i: (i, 0)),
                pl.BlockSpec((tile_n, 1), lambda i: (i, 0)),
                pl.BlockSpec((1, c), lambda i: (0, 0)),
            ],
            out_specs=[
                pl.BlockSpec((1, 1), lambda i: (0, 0)),
                pl.BlockSpec((1, 1), lambda i: (0, 0)),
            ],
        ),
        compiler_params=pltpu.CompilerParams(
            dimension_semantics=("arbitrary",),
            vmem_limit_bytes=vmem_limit,
        ),
    )(x, t2d, w2d)

    return lsum[0, 0] / wsum[0, 0]


def cbce_loss_ref(x, target, weight):
    logp = jax.nn.log_softmax(x.astype(jnp.float32), axis=-1)
    nll = -jnp.take_along_axis(logp, target[:, None], axis=-1)[:, 0]
    w_t = weight[target]
    return jnp.sum(w_t * nll) / jnp.sum(w_t)


if __name__ == "__main__":
    lt_factor = 10.0
    num_classes = 16
    batch = 64

    # Deterministic parameter init (same as module __init__: linspace weights).
    weight = jnp.asarray(
        np.linspace(1.0 / lt_factor, 1.0, num=num_classes), dtype=jnp.float32
    )

    key = jax.random.PRNGKey(0)
    kx, kt = jax.random.split(key)
    x = jax.random.normal(kx, (batch, num_classes), dtype=jnp.float32)
    target = jax.random.randint(kt, (batch,), 0, num_classes, dtype=jnp.int32)

    loss = jax.block_until_ready(cbce_loss(x, target, weight))
    ref = jax.block_until_ready(cbce_loss_ref(x, target, weight))
    assert np.allclose(np.asarray(loss), np.asarray(ref), atol=1e-5, rtol=1e-5), (
        loss, ref,
    )

    # Ragged batch: exercises the in-kernel row-validity mask (no wrapper pad)
    # and multi-tile accumulation into the resident output blocks.
    batch2 = 300
    k2x, k2t = jax.random.split(jax.random.PRNGKey(1))
    x2 = jax.random.normal(k2x, (batch2, num_classes), dtype=jnp.float32)
    t2 = jax.random.randint(k2t, (batch2,), 0, num_classes, dtype=jnp.int32)
    loss2 = jax.block_until_ready(cbce_loss(x2, t2, weight, tile_n=64))
    ref2 = jax.block_until_ready(cbce_loss_ref(x2, t2, weight))
    assert np.allclose(np.asarray(loss2), np.asarray(ref2), atol=1e-5, rtol=1e-5), (
        loss2, ref2,
    )

    # bf16 logits path (kernel upcasts to f32; ref sees the same bf16 values,
    # so tolerances stay tight).
    x3 = x2.astype(jnp.bfloat16)
    loss3 = jax.block_until_ready(cbce_loss(x3, t2, weight))
    ref3 = jax.block_until_ready(cbce_loss_ref(x3.astype(jnp.float32), t2, weight))
    assert np.allclose(np.asarray(loss3), np.asarray(ref3), atol=1e-4, rtol=1e-4), (
        loss3, ref3,
    )

    print("KERNEL_OK")
</pallas_src>

<mosaic_0001>
module attributes {stable_mosaic.version = 11 : i64} {
  func.func @kernel(%arg0: i32, %arg1: memref<64x16xf32, #tpu.memory_space<vmem>>, %arg2: memref<64x1xi32, #tpu.memory_space<vmem>>, %arg3: memref<1x16xf32, #tpu.memory_space<vmem>>, %arg4: memref<1x1xf32, #tpu.memory_space<vmem>>, %arg5: memref<1x1xf32, #tpu.memory_space<vmem>>) attributes {dimension_semantics = [#tpu.dimension_semantics<arbitrary>], iteration_bounds = array<i64: 1>, scalar_prefetch = 0 : i64, scratch_operands = 0 : i64, tpu.core_type = #tpu.core_type<tc>, window_params = [{transform_indices = @transform_0, window_bounds = array<i64: 64, 16>}, {transform_indices = @transform_1, window_bounds = array<i64: 64, 1>}, {pipeline_mode = #tpu.pipeline_mode<synchronous>, transform_indices = @transform_2, window_bounds = array<i64: 1, 16>}, {pipeline_mode = #tpu.pipeline_mode<synchronous>, transform_indices = @transform_3, window_bounds = array<i64: 1, 1>}, {pipeline_mode = #tpu.pipeline_mode<synchronous>, transform_indices = @transform_4, window_bounds = array<i64: 1, 1>}]} {
    %c0_i32 = arith.constant 0 : i32
    %0 = arith.cmpi eq, %arg0, %c0_i32 : i32
    %1 = arith.extui %0 : i1 to i32
    %c0_i32_0 = arith.constant 0 : i32
    %2 = arith.cmpi ne, %1, %c0_i32_0 : i32
    scf.if %2 {
      %cst_24 = arith.constant 0.000000e+00 : f32
      %59 = vector.broadcast %cst_24 : f32 to vector<1x1xf32>
      %c0_25 = arith.constant 0 : index
      %c0_26 = arith.constant 0 : index
      %60 = vector.load %arg4[%c0_25, %c0_26] : memref<1x1xf32, #tpu.memory_space<vmem>>, vector<1x1xf32>
      tpu.vector_store %arg4[%c0_25, %c0_26], %59 {strides = array<i32>} : memref<1x1xf32, #tpu.memory_space<vmem>>, vector<1x1xf32>,
      %cst_27 = arith.constant 0.000000e+00 : f32
      %61 = vector.broadcast %cst_27 : f32 to vector<1x1xf32>
      %c0_28 = arith.constant 0 : index
      %c0_29 = arith.constant 0 : index
      %62 = vector.load %arg5[%c0_28, %c0_29] : memref<1x1xf32, #tpu.memory_space<vmem>>, vector<1x1xf32>
      tpu.vector_store %arg5[%c0_28, %c0_29], %61 {strides = array<i32>} : memref<1x1xf32, #tpu.memory_space<vmem>>, vector<1x1xf32>,
    } else {
    }
    %c0 = arith.constant 0 : index
    %c0_1 = arith.constant 0 : index
    %3 = vector.load %arg1[%c0, %c0_1] : memref<64x16xf32, #tpu.memory_space<vmem>>, vector<64x16xf32>
    %c0_2 = arith.constant 0 : index
    %c0_3 = arith.constant 0 : index
    %4 = vector.load %arg2[%c0_2, %c0_3] : memref<64x1xi32, #tpu.memory_space<vmem>>, vector<64x1xi32>
    %c0_4 = arith.constant 0 : index
    %c0_5 = arith.constant 0 : index
    %5 = vector.load %arg3[%c0_4, %c0_5] : memref<1x16xf32, #tpu.memory_space<vmem>>, vector<1x16xf32>
    %6 = tpu.iota {dimensions = array<i32: 0>} : vector<64x1xi32>
    %c64_i32 = arith.constant 64 : i32
    %7 = arith.muli %arg0, %c64_i32 : i32
    %8 = vector.broadcast %7 : i32 to vector<64x1xi32>
    %9 = arith.addi %6, %8 : vector<64x1xi32>
    %c64_i32_6 = arith.constant 64 : i32
    %10 = vector.broadcast %c64_i32_6 : i32 to vector<64x1xi32>
    %11 = arith.cmpi slt, %9, %10 : vector<64x1xi32>
    %cst = arith.constant 0.000000e+00 : f32
    %12 = vector.shape_cast %11 : vector<64x1xi1> to vector<64x1xi1>
    %13 = vector.broadcast %12 : vector<64x1xi1> to vector<64x16xi1>
    %14 = vector.broadcast %cst : f32 to vector<64x16xf32>
    %15 = arith.select %13, %3, %14 : vector<64x16xi1>, vector<64x16xf32>
    %cst_7 = arith.constant dense<0xFF800000> : vector<64xf32>
    %16 = vector.multi_reduction <maximumf>, %15, %cst_7 [1] : vector<64x16xf32> to vector<64xf32>
    %17 = vector.shape_cast %16 : vector<64xf32> to vector<64x1xf32>
    %18 = vector.broadcast %17 : vector<64x1xf32> to vector<64x16xf32>
    %19 = arith.subf %15, %18 : vector<64x16xf32>
    %20 = math.exp %19 : vector<64x16xf32>
    %cst_8 = arith.constant dense<0.000000e+00> : vector<64xf32>
    %21 = vector.multi_reduction <add>, %20, %cst_8 [1] : vector<64x16xf32> to vector<64xf32>
    %22 = vector.shape_cast %21 : vector<64xf32> to vector<64x1xf32>
    %23 = math.log %22 : vector<64x1xf32>
    %24 = arith.addf %23, %17 : vector<64x1xf32>
    %25 = tpu.iota {dimensions = array<i32: 1>} : vector<1x16xi32>
    %26 = vector.broadcast %25 : vector<1x16xi32> to vector<64x16xi32>
    %27 = vector.broadcast %4 : vector<64x1xi32> to vector<64x16xi32>
    %28 = arith.cmpi eq, %26, %27 : vector<64x16xi32>
    %cst_9 = arith.constant 0.000000e+00 : f32
    %29 = vector.broadcast %cst_9 : f32 to vector<64x16xf32>
    %30 = arith.select %28, %15, %29 : vector<64x16xi1>, vector<64x16xf32>
    %cst_10 = arith.constant dense<0.000000e+00> : vector<64xf32>
    %31 = vector.multi_reduction <add>, %30, %cst_10 [1] : vector<64x16xf32> to vector<64xf32>
    %32 = vector.shape_cast %31 : vector<64xf32> to vector<64x1xf32>
    %cst_11 = arith.constant 0.000000e+00 : f32
    %33 = vector.shape_cast %5 : vector<1x16xf32> to vector<1x16xf32>
    %34 = vector.broadcast %33 : vector<1x16xf32> to vector<64x16xf32>
    %35 = vector.broadcast %cst_11 : f32 to vector<64x16xf32>
    %36 = arith.select %28, %34, %35 : vector<64x16xi1>, vector<64x16xf32>
    %cst_12 = arith.constant dense<0.000000e+00> : vector<64xf32>
    %37 = vector.multi_reduction <add>, %36, %cst_12 [1] : vector<64x16xf32> to vector<64xf32>
    %38 = vector.shape_cast %37 : vector<64xf32> to vector<64x1xf32>
    %cst_13 = arith.constant 0.000000e+00 : f32
    %39 = vector.broadcast %cst_13 : f32 to vector<64x1xf32>
    %40 = arith.select %11, %38, %39 : vector<64x1xi1>, vector<64x1xf32>
    %41 = arith.subf %24, %32 : vector<64x1xf32>
    %c0_14 = arith.constant 0 : index
    %c0_15 = arith.constant 0 : index
    %42 = vector.load %arg4[%c0_14, %c0_15] : memref<1x1xf32, #tpu.memory_space<vmem>>, vector<1x1xf32>
    %43 = arith.mulf %40, %41 : vector<64x1xf32>
    %44 = vector.shape_cast %43 : vector<64x1xf32> to vector<1x64x1xf32>
    %cst_16 = arith.constant dense<0.000000e+00> : vector<1xf32>
    %45 = vector.multi_reduction <add>, %44, %cst_16 [1, 2] : vector<1x64x1xf32> to vector<1xf32>
    %46 = vector.shape_cast %45 : vector<1xf32> to vector<1x1x1xf32>
    %47 = vector.extract %46[0, 0, 0] : f32 from vector<1x1x1xf32>
    %48 = vector.broadcast %47 : f32 to vector<1x1xf32>
    %49 = arith.addf %42, %48 : vector<1x1xf32>
    %c0_17 = arith.constant 0 : index
    %c0_18 = arith.constant 0 : index
    %50 = vector.load %arg4[%c0_17, %c0_18] : memref<1x1xf32, #tpu.memory_space<vmem>>, vector<1x1xf32>
    tpu.vector_store %arg4[%c0_17, %c0_18], %49 {strides = array<i32>} : memref<1x1xf32, #tpu.memory_space<vmem>>, vector<1x1xf32>,
    %c0_19 = arith.constant 0 : index
    %c0_20 = arith.constant 0 : index
    %51 = vector.load %arg5[%c0_19, %c0_20] : memref<1x1xf32, #tpu.memory_space<vmem>>, vector<1x1xf32>
    %52 = vector.shape_cast %40 : vector<64x1xf32> to vector<1x64x1xf32>
    %cst_21 = arith.constant dense<0.000000e+00> : vector<1xf32>
    %53 = vector.multi_reduction <add>, %52, %cst_21 [1, 2] : vector<1x64x1xf32> to vector<1xf32>
    %54 = vector.shape_cast %53 : vector<1xf32> to vector<1x1x1xf32>
    %55 = vector.extract %54[0, 0, 0] : f32 from vector<1x1x1xf32>
    %56 = vector.broadcast %55 : f32 to vector<1x1xf32>
    %57 = arith.addf %51, %56 : vector<1x1xf32>
    %c0_22 = arith.constant 0 : index
    %c0_23 = arith.constant 0 : index
    %58 = vector.load %arg5[%c0_22, %c0_23] : memref<1x1xf32, #tpu.memory_space<vmem>>, vector<1x1xf32>
    tpu.vector_store %arg5[%c0_22, %c0_23], %57 {strides = array<i32>} : memref<1x1xf32, #tpu.memory_space<vmem>>, vector<1x1xf32>,
    return
  }
  func.func @transform_0(%arg0: i32) -> (i32, i32) {
    %c0_i32 = arith.constant 0 : i32
    %c0_i32_0 = arith.constant 0 : i32
    return %arg0, %c0_i32 : i32, i32
  }
  func.func @transform_1(%arg0: i32) -> (i32, i32) {
    %c0_i32 = arith.constant 0 : i32
    %c0_i32_0 = arith.constant 0 : i32
    return %arg0, %c0_i32 : i32, i32
  }
  func.func @transform_2(%arg0: i32) -> (i32, i32) {
    %c0_i32 = arith.constant 0 : i32
    %c0_i32_0 = arith.constant 0 : i32
    %c0_i32_1 = arith.constant 0 : i32
    return %c0_i32, %c0_i32_0 : i32, i32
  }
  func.func @transform_3(%arg0: i32) -> (i32, i32) {
    %c0_i32 = arith.constant 0 : i32
    %c0_i32_0 = arith.constant 0 : i32
    %c0_i32_1 = arith.constant 0 : i32
    return %c0_i32, %c0_i32_0 : i32, i32
  }
  func.func @transform_4(%arg0: i32) -> (i32, i32) {
    %c0_i32 = arith.constant 0 : i32
    %c0_i32_0 = arith.constant 0 : i32
    %c0_i32_1 = arith.constant 0 : i32
    return %c0_i32, %c0_i32_0 : i32, i32
  }
}

</mosaic_0001>

<llo_original>
// kernel: tpu_custom_call.1
$region0: #{tpu_custom_call.1}
  #allocation0 [shape = 'u32[]', space=smem, size = 0x4, offset = 0x4, fixed_abs, tag = 'smem constant byte address 0x4 - core index']
  #allocation1 [shape = 'u32[144,128]{1,0:T(1,128)}', space=vmem, size = 0x12000, scoped, tag = 'internal scratch']
  %s0 = inlined_call_operand.vmem [shape: f32[64,16], index: 0, kind: input, shape index: {}]
  %s1 = inlined_call_operand.vmem [shape: s32[64,1], index: 1, kind: input, shape index: {}]
  %s2 = inlined_call_operand.vmem [shape: f32[1,16], index: 2, kind: input, shape index: {}]
  %s3 = inlined_call_operand.hbm [shape: f32[1,1], index: 3, kind: output, shape index: {0}]
  %s4 = inlined_call_operand.hbm [shape: f32[1,1], index: 4, kind: output, shape index: {1}]
  %5 = xla_tuple %s3, %s4
  %s6 = sld [smem:[#allocation0]]
  $region34: #{tpu_custom_call.1} parent=0
    _
  %s8 = ssub.s32 1, %s6
  %s9 = scalar_select 0, %s8, %s6
  $region1: #{tpu_custom_call.1} parent=0
    #allocation2 [shape = 'u8[512]{0}', space=vmem, size = 0x400, scoped, tag = 'output window, operand 0, single buffered']
    #allocation3 [shape = 's32[1]{0}', space=sflag, size = 0x4, scoped, tag = 'scoped memory for tpu_custom_call.1']
    #allocation4 [shape = 'u8[512]{0}', space=vmem, size = 0x400, scoped, tag = 'output window, operand 1, single buffered']
    #allocation5 [shape = 's32[1]{0}', space=sflag, size = 0x4, scoped, tag = 'scoped memory for tpu_custom_call.1']
    %10 = vsyncpa [#allocation3], 0
    %11 = vsyncpa [#allocation5], 0
    // Predicated region
    $region2: #{tpu_custom_call.1} parent=1 // pred_check
      _
    $region3: #{tpu_custom_call.1} parent=1 // pred_check_branch
      %13 = sbr.rel (0) target = $region5
    $region4: #{tpu_custom_call.1} parent=1 // pred_region
      _
    $region5: #{tpu_custom_call.1} parent=1 // pred_fallthru
      _
    // Predicated region
    $region6: #{tpu_custom_call.1} parent=1 // pred_check
      _
    $region7: #{tpu_custom_call.1} parent=1 // pred_check_branch
      %15 = sbr.rel (0) target = $region9
    $region8: #{tpu_custom_call.1} parent=1 // pred_region
      _
    $region9: #{tpu_custom_call.1} parent=1 // pred_fallthru
      _
    // Predicated region
    $region10: #{tpu_custom_call.1} parent=1 // pred_check
      _
    $region11: #{tpu_custom_call.1} parent=1 // pred_check_branch
      %17 = sbr.rel (0) target = $region13
    $region12: #{tpu_custom_call.1} parent=1 // pred_region
      _
    $region13: #{tpu_custom_call.1} parent=1 // pred_fallthru
      _
    %p18 = scmp.eq.s32.totalorder 0, 0
    // Predicated region
    $region14: #{tpu_custom_call.1} parent=1 // pred_check
      %p19 = pneg %p18
    $region15: #{tpu_custom_call.1} parent=1 // pred_check_branch
      %21 = sbr.rel (%p19) target = $region17
    $region16: #{tpu_custom_call.1} parent=1 // pred_region
      %vm22 = vcmask 0
      %23 = vst.msk [vmem:[#allocation2] sm:$0x1] %vm22, 0.0
      %24 = vst.msk [vmem:[#allocation4] sm:$0x1] %vm22, 0.0
    $region17: #{tpu_custom_call.1} parent=1 // pred_fallthru
      _
    %v25 = vld [vmem:[%s0] sm:$0xff]
    %v26 = vld [vmem:[%s0 + $0x8] sm:$0xff]
    %v27 = vld [vmem:[%s0 + $0x10] sm:$0xff]
    %v28 = vld [vmem:[%s0 + $0x18] sm:$0xff]
    %v29 = vld [vmem:[%s0 + $0x20] sm:$0xff]
    %v30 = vld [vmem:[%s0 + $0x28] sm:$0xff]
    %v31 = vld [vmem:[%s0 + $0x30] sm:$0xff]
    %v32 = vld [vmem:[%s0 + $0x38] sm:$0xff]
    %v33 = vld [vmem:[%s1] sm:$0xff]
    %v34 = vld [vmem:[%s1 + $0x8] sm:$0xff]
    %v35 = vld [vmem:[%s1 + $0x10] sm:$0xff]
    %v36 = vld [vmem:[%s1 + $0x18] sm:$0xff]
    %v37 = vld [vmem:[%s1 + $0x20] sm:$0xff]
    %v38 = vld [vmem:[%s1 + $0x28] sm:$0xff]
    %v39 = vld [vmem:[%s1 + $0x30] sm:$0xff]
    %v40 = vld [vmem:[%s1 + $0x38] sm:$0xff]
    %v41 = vld [vmem:[%s2] sm:$0x1]
    %v42 = vlaneseq
    %v43 = vshrl.u32 %v42, 7
    %v44 = vadd.s32 %v43, 8
    %v45 = vadd.s32 %v43, 16
    %v46 = vadd.s32 %v43, 24
    %v47 = vadd.s32 %v43, 32
    %v48 = vadd.s32 %v43, 40
    %v49 = vadd.s32 %v43, 48
    %v50 = vadd.s32 %v43, 56
    %s51 = smul.u32 0, 64
    %v52 = vstv %s51
    %v53 = vadd.s32 %v43, %v52
    %v54 = vadd.s32 %v44, %v52
    %v55 = vadd.s32 %v45, %v52
    %v56 = vadd.s32 %v46, %v52
    %v57 = vadd.s32 %v47, %v52
    %v58 = vadd.s32 %v48, %v52
    %v59 = vadd.s32 %v49, %v52
    %v60 = vadd.s32 %v50, %v52
    %vm61 = vcmp.lt.s32.totalorder %v53, 64
    %vm62 = vcmp.lt.s32.totalorder %v54, 64
    %vm63 = vcmp.lt.s32.totalorder %v55, 64
    %vm64 = vcmp.lt.s32.totalorder %v56, 64
    %vm65 = vcmp.lt.s32.totalorder %v57, 64
    %vm66 = vcmp.lt.s32.totalorder %v58, 64
    %vm67 = vcmp.lt.s32.totalorder %v59, 64
    %vm68 = vcmp.lt.s32.totalorder %v60, 64
    %v69 = vsel %vm61, 1, 0
    %v70 = vsel %vm62, 1, 0
    %v71 = vsel %vm63, 1, 0
    %v72 = vsel %vm64, 1, 0
    %v73 = vsel %vm65, 1, 0
    %v74 = vsel %vm66, 1, 0
    %v75 = vsel %vm67, 1, 0
    %v76 = vsel %vm68, 1, 0
    %vm77 = vcmp.eq.s32.totalorder %v69, 1
    %vm78 = vcmp.eq.s32.totalorder %v70, 1
    %vm79 = vcmp.eq.s32.totalorder %v71, 1
    %vm80 = vcmp.eq.s32.totalorder %v72, 1
    %vm81 = vcmp.eq.s32.totalorder %v73, 1
    %vm82 = vcmp.eq.s32.totalorder %v74, 1
    %vm83 = vcmp.eq.s32.totalorder %v75, 1
    %vm84 = vcmp.eq.s32.totalorder %v76, 1
    %v85 = vsel %vm77, %v25, 0.0
    %v86 = vsel %vm78, %v26, 0.0
    %v87 = vsel %vm79, %v27, 0.0
    %v88 = vsel %vm80, %v28, 0.0
    %v89 = vsel %vm81, %v29, 0.0
    %v90 = vsel %vm82, %v30, 0.0
    %v91 = vsel %vm83, %v31, 0.0
    %v92 = vsel %vm84, %v32, 0.0
    %vm93 = vcmask 130048
    %v94 = vsel %vm93, %v85, -inf
    %95 = vmax.xlane.f32.xlu0 %v94
    %v96 = vpop.xlane.xlu0 %95
    %v97 = vsel %vm93, %v86, -inf
    %98 = vmax.xlane.f32.xlu0 %v97
    %v99 = vpop.xlane.xlu0 %98
    %v100 = vsel %vm93, %v87, -inf
    %101 = vmax.xlane.f32.xlu0 %v100
    %v102 = vpop.xlane.xlu0 %101
    %v103 = vsel %vm93, %v88, -inf
    %104 = vmax.xlane.f32.xlu0 %v103
    %v105 = vpop.xlane.xlu0 %104
    %v106 = vsel %vm93, %v89, -inf
    %107 = vmax.xlane.f32.xlu0 %v106
    %v108 = vpop.xlane.xlu0 %107
    %v109 = vsel %vm93, %v90, -inf
    %110 = vmax.xlane.f32.xlu0 %v109
    %v111 = vpop.xlane.xlu0 %110
    %v112 = vsel %vm93, %v91, -inf
    %113 = vmax.xlane.f32.xlu0 %v112
    %v114 = vpop.xlane.xlu0 %113
    %v115 = vsel %vm93, %v92, -inf
    %116 = vmax.xlane.f32.xlu0 %v115
    %v117 = vpop.xlane.xlu0 %116
    %v118 = vsub.f32 %v85, %v96
    %v119 = vsub.f32 %v86, %v99
    %v120 = vsub.f32 %v87, %v102
    %v121 = vsub.f32 %v88, %v105
    %v122 = vsub.f32 %v89, %v108
    %v123 = vsub.f32 %v90, %v111
    %v124 = vsub.f32 %v91, %v114
    %v125 = vsub.f32 %v92, %v117
    %v126 = vmul.f32 %v118, 1.442695
    %v127 = vpow.pop %v126
    %v128 = vmul.f32 %v119, 1.442695
    %v129 = vpow.pop %v128
    %v130 = vmul.f32 %v120, 1.442695
    %v131 = vpow.pop %v130
    %v132 = vmul.f32 %v121, 1.442695
    %v133 = vpow.pop %v132
    %v134 = vmul.f32 %v122, 1.442695
    %v135 = vpow.pop %v134
    %v136 = vmul.f32 %v123, 1.442695
    %v137 = vpow.pop %v136
    %v138 = vmul.f32 %v124, 1.442695
    %v139 = vpow.pop %v138
    %v140 = vmul.f32 %v125, 1.442695
    %v141 = vpow.pop %v140
    %v142 = vsel %vm93, %v127, 0.0
    %143 = vadd.xlane.f32.xlu0 %v142
    %v144 = vpop.xlane.xlu0 %143
    %v145 = vsel %vm93, %v129, 0.0
    %146 = vadd.xlane.f32.xlu0 %v145
    %v147 = vpop.xlane.xlu0 %146
    %v148 = vsel %vm93, %v131, 0.0
    %149 = vadd.xlane.f32.xlu0 %v148
    %v150 = vpop.xlane.xlu0 %149
    %v151 = vsel %vm93, %v133, 0.0
    %152 = vadd.xlane.f32.xlu0 %v151
    %v153 = vpop.xlane.xlu0 %152
    %v154 = vsel %vm93, %v135, 0.0
    %155 = vadd.xlane.f32.xlu0 %v154
    %v156 = vpop.xlane.xlu0 %155
    %v157 = vsel %vm93, %v137, 0.0
    %158 = vadd.xlane.f32.xlu0 %v157
    %v159 = vpop.xlane.xlu0 %158
    %v160 = vsel %vm93, %v139, 0.0
    %161 = vadd.xlane.f32.xlu0 %v160
    %v162 = vpop.xlane.xlu0 %161
    %v163 = vsel %vm93, %v141, 0.0
    %164 = vadd.xlane.f32.xlu0 %v163
    %v165 = vpop.xlane.xlu0 %164
    %v166 = vlog2.pop %v144
    %v167 = vmul.f32 %v166, 0.6931472
    %v168 = vlog2.pop %v147
    %v169 = vmul.f32 %v168, 0.6931472
    %v170 = vlog2.pop %v150
    %v171 = vmul.f32 %v170, 0.6931472
    %v172 = vlog2.pop %v153
    %v173 = vmul.f32 %v172, 0.6931472
    %v174 = vlog2.pop %v156
    %v175 = vmul.f32 %v174, 0.6931472
    %v176 = vlog2.pop %v159
    %v177 = vmul.f32 %v176, 0.6931472
    %v178 = vlog2.pop %v162
    %v179 = vmul.f32 %v178, 0.6931472
    %v180 = vlog2.pop %v165
    %v181 = vmul.f32 %v180, 0.6931472
    %v182 = vadd.f32 %v167, %v96
    %v183 = vadd.f32 %v169, %v99
    %v184 = vadd.f32 %v171, %v102
    %v185 = vadd.f32 %v173, %v105
    %v186 = vadd.f32 %v175, %v108
    %v187 = vadd.f32 %v177, %v111
    %v188 = vadd.f32 %v179, %v114
    %v189 = vadd.f32 %v181, %v117
    %v190 = vlaneseq
    %v191 = vand.u32 %v190, 127
    %192 = vset.pattern.permute.xlu0 0
    %193 = vperm.xlu0 %192, %v33
    %v194 = vpop.permute.xlu0 %193
    %195 = vset.pattern.permute.xlu0 0
    %196 = vperm.xlu0 %195, %v34
    %v197 = vpop.permute.xlu0 %196
    %198 = vset.pattern.permute.xlu0 0
    %199 = vperm.xlu0 %198, %v35
    %v200 = vpop.permute.xlu0 %199
    %201 = vset.pattern.permute.xlu0 0
    %202 = vperm.xlu0 %201, %v36
    %v203 = vpop.permute.xlu0 %202
    %204 = vset.pattern.permute.xlu0 0
    %205 = vperm.xlu0 %204, %v37
    %v206 = vpop.permute.xlu0 %205
    %207 = vset.pattern.permute.xlu0 0
    %208 = vperm.xlu0 %207, %v38
    %v209 = vpop.permute.xlu0 %208
    %210 = vset.pattern.permute.xlu0 0
    %211 = vperm.xlu0 %210, %v39
    %v212 = vpop.permute.xlu0 %211
    %213 = vset.pattern.permute.xlu0 0
    %214 = vperm.xlu0 %213, %v40
    %v215 = vpop.permute.xlu0 %214
    %vm216 = vcmp.eq.s32.totalorder %v191, %v194
    %vm217 = vcmp.eq.s32.totalorder %v191, %v197
    %vm218 = vcmp.eq.s32.totalorder %v191, %v200
    %vm219 = vcmp.eq.s32.totalorder %v191, %v203
    %vm220 = vcmp.eq.s32.totalorder %v191, %v206
    %vm221 = vcmp.eq.s32.totalorder %v191, %v209
    %vm222 = vcmp.eq.s32.totalorder %v191, %v212
    %vm223 = vcmp.eq.s32.totalorder %v191, %v215
    %v224 = vsel %vm216, %v85, 0.0
    %v225 = vsel %vm217, %v86, 0.0
    %v226 = vsel %vm218, %v87, 0.0
    %v227 = vsel %vm219, %v88, 0.0
    %v228 = vsel %vm220, %v89, 0.0
    %v229 = vsel %vm221, %v90, 0.0
    %v230 = vsel %vm222, %v91, 0.0
    %v231 = vsel %vm223, %v92, 0.0
    %v232 = vsel %vm93, %v224, 0.0
    %233 = vadd.xlane.f32.xlu0 %v232
    %v234 = vpop.xlane.xlu0 %233
    %v235 = vsel %vm93, %v225, 0.0
    %236 = vadd.xlane.f32.xlu0 %v235
    %v237 = vpop.xlane.xlu0 %236
    %v238 = vsel %vm93, %v226, 0.0
    %239 = vadd.xlane.f32.xlu0 %v238
    %v240 = vpop.xlane.xlu0 %239
    %v241 = vsel %vm93, %v227, 0.0
    %242 = vadd.xlane.f32.xlu0 %v241
    %v243 = vpop.xlane.xlu0 %242
    %v244 = vsel %vm93, %v228, 0.0
    %245 = vadd.xlane.f32.xlu0 %v244
    %v246 = vpop.xlane.xlu0 %245
    %v247 = vsel %vm93, %v229, 0.0
    %248 = vadd.xlane.f32.xlu0 %v247
    %v249 = vpop.xlane.xlu0 %248
    %v250 = vsel %vm93, %v230, 0.0
    %251 = vadd.xlane.f32.xlu0 %v250
    %v252 = vpop.xlane.xlu0 %251
    %v253 = vsel %vm93, %v231, 0.0
    %254 = vadd.xlane.f32.xlu0 %v253
    %v255 = vpop.xlane.xlu0 %254
    %v257 = vlaneseq
    %v258 = vshrl.u32 %v257, 7
    %v259 = vsub.s32 0, %v258
    %v260 = vrot.slane %v41, %v259
    %v262 = vsel %vm216, %v260, 0.0
    %v263 = vsel %vm217, %v260, 0.0
    %v264 = vsel %vm218, %v260, 0.0
    %v265 = vsel %vm219, %v260, 0.0
    %v266 = vsel %vm220, %v260, 0.0
    %v267 = vsel %vm221, %v260, 0.0
    %v268 = vsel %vm222, %v260, 0.0
    %v269 = vsel %vm223, %v260, 0.0
    %v270 = vsel %vm93, %v262, 0.0
    %271 = vadd.xlane.f32.xlu0 %v270
    %v272 = vpop.xlane.xlu0 %271
    %v273 = vsel %vm93, %v263, 0.0
    %274 = vadd.xlane.f32.xlu0 %v273
    %v275 = vpop.xlane.xlu0 %274
    %v276 = vsel %vm93, %v264, 0.0
    %277 = vadd.xlane.f32.xlu0 %v276
    %v278 = vpop.xlane.xlu0 %277
    %v279 = vsel %vm93, %v265, 0.0
    %280 = vadd.xlane.f32.xlu0 %v279
    %v281 = vpop.xlane.xlu0 %280
    %v282 = vsel %vm93, %v266, 0.0
    %283 = vadd.xlane.f32.xlu0 %v282
    %v284 = vpop.xlane.xlu0 %283
    %v285 = vsel %vm93, %v267, 0.0
    %286 = vadd.xlane.f32.xlu0 %v285
    %v287 = vpop.xlane.xlu0 %286
    %v288 = vsel %vm93, %v268, 0.0
    %289 = vadd.xlane.f32.xlu0 %v288
    %v290 = vpop.xlane.xlu0 %289
    %v291 = vsel %vm93, %v269, 0.0
    %292 = vadd.xlane.f32.xlu0 %v291
    %v293 = vpop.xlane.xlu0 %292
    %v294 = vsel %vm61, %v272, 0.0
    %v295 = vsel %vm62, %v275, 0.0
    %v296 = vsel %vm63, %v278, 0.0
    %v297 = vsel %vm64, %v281, 0.0
    %v298 = vsel %vm65, %v284, 0.0
    %v299 = vsel %vm66, %v287, 0.0
    %v300 = vsel %vm67, %v290, 0.0
    %v301 = vsel %vm68, %v293, 0.0
    %v302 = vsub.f32 %v182, %v234
    %v303 = vsub.f32 %v183, %v237
    %v304 = vsub.f32 %v184, %v240
    %v305 = vsub.f32 %v185, %v243
    %v306 = vsub.f32 %v186, %v246
    %v307 = vsub.f32 %v187, %v249
    %v308 = vsub.f32 %v188, %v252
    %v309 = vsub.f32 %v189, %v255
    %v310 = vld [vmem:[#allocation2] sm:$0x1]
    %v311 = vmul.f32 %v294, %v302
    %v312 = vmul.f32 %v295, %v303
    %v313 = vmul.f32 %v296, %v304
    %v314 = vmul.f32 %v297, %v305
    %v315 = vmul.f32 %v298, %v306
    %v316 = vmul.f32 %v299, %v307
    %v317 = vmul.f32 %v300, %v308
    %v318 = vmul.f32 %v301, %v309
    %vm319 = vcmask 7168
    %v320 = vsel %vm319, %v311, 0.0
    %v321 = vsel %vm319, %v312, 0.0
    %v322 = vadd.f32 %v320, %v321
    %v323 = vsel %vm319, %v313, 0.0
    %v324 = vadd.f32 %v322, %v323
    %v325 = vsel %vm319, %v314, 0.0
    %v326 = vadd.f32 %v324, %v325
    %v327 = vsel %vm319, %v315, 0.0
    %v328 = vadd.f32 %v326, %v327
    %v329 = vsel %vm319, %v316, 0.0
    %v330 = vadd.f32 %v328, %v329
    %v331 = vsel %vm319, %v317, 0.0
    %v332 = vadd.f32 %v330, %v331
    %v333 = vsel %vm319, %v318, 0.0
    %v334 = vadd.f32 %v332, %v333
    %335 = vadd.xlane.f32.xlu0 %v334
    %v336 = vpop.xlane.xlu0 %335
    %v337 = vrot.slane %v336, 4
    %v338 = vadd.f32 %v336, %v337
    %v339 = vrot.slane %v338, 2
    %v340 = vadd.f32 %v338, %v339
    %v341 = vrot.slane %v340, 1
    %v342 = vadd.f32 %v340, %v341
    %s343 = vtos %v342
    %v344 = vstv %s343
    %v345 = vadd.f32 %v310, %v344
    %vm346 = vcmask 0
    %347 = vst.msk [vmem:[#allocation2] sm:$0x1] %vm346, %v345
    %v348 = vld [vmem:[#allocation4] sm:$0x1]
    %v349 = vsel %vm319, %v294, 0.0
    %v350 = vsel %vm319, %v295, 0.0
    %v351 = vadd.f32 %v349, %v350
    %v352 = vsel %vm319, %v296, 0.0
    %v353 = vadd.f32 %v351, %v352
    %v354 = vsel %vm319, %v297, 0.0
    %v355 = vadd.f32 %v353, %v354
    %v356 = vsel %vm319, %v298, 0.0
    %v357 = vadd.f32 %v355, %v356
    %v358 = vsel %vm319, %v299, 0.0
    %v359 = vadd.f32 %v357, %v358
    %v360 = vsel %vm319, %v300, 0.0
    %v361 = vadd.f32 %v359, %v360
    %v362 = vsel %vm319, %v301, 0.0
    %v363 = vadd.f32 %v361, %v362
    %364 = vadd.xlane.f32.xlu0 %v363
    %v365 = vpop.xlane.xlu0 %364
    %v366 = vrot.slane %v365, 4
    %v367 = vadd.f32 %v365, %v366
    %v368 = vrot.slane %v367, 2
    %v369 = vadd.f32 %v367, %v368
    %v370 = vrot.slane %v369, 1
    %v371 = vadd.f32 %v369, %v370
    %s372 = vtos %v371
    %v373 = vstv %s372
    %v374 = vadd.f32 %v348, %v373
    %375 = vst.msk [vmem:[#allocation4] sm:$0x1] %vm346, %v374
    // Predicated region
    $region18: #{tpu_custom_call.1} parent=1 // pred_check
      _
    $region19: #{tpu_custom_call.1} parent=1 // pred_check_branch
      %377 = sbr.rel (0) target = $region21
    $region20: #{tpu_custom_call.1} parent=1 // pred_region
      %s379 = ssub.s32 16, 16
      %380 = vsyncadd [#allocation3], %s379
      %s382 = sshll.u32 [#allocation2], 4
      %s383 = int_to_ptr.vmem [resolvable:$true] %s382
      %385 = dma.vmem_to_hbm [thread:$0]  %s383, 16, %s3, [#allocation3]
    $region21: #{tpu_custom_call.1} parent=1 // pred_fallthru
      _
    // Predicated region
    $region22: #{tpu_custom_call.1} parent=1 // pred_check
      _
    $region23: #{tpu_custom_call.1} parent=1 // pred_check_branch
      %387 = sbr.rel (0) target = $region25
    $region24: #{tpu_custom_call.1} parent=1 // pred_region
      %s389 = ssub.s32 16, 16
      %390 = vsyncadd [#allocation5], %s389
      %s392 = sshll.u32 [#allocation4], 4
      %s393 = int_to_ptr.vmem [resolvable:$true] %s392
      %395 = dma.vmem_to_hbm [thread:$0]  %s393, 16, %s4, [#allocation5]
    $region25: #{tpu_custom_call.1} parent=1 // pred_fallthru
      _
    // Predicated region
    $region26: #{tpu_custom_call.1} parent=1 // pred_check
      _
    $region27: #{tpu_custom_call.1} parent=1 // pred_check_branch
      %397 = sbr.rel (0) target = $region29
    $region28: #{tpu_custom_call.1} parent=1 // pred_region
      %398 = dma.done [#allocation3], 16
    $region29: #{tpu_custom_call.1} parent=1 // pred_fallthru
      _
    // Predicated region
    $region30: #{tpu_custom_call.1} parent=1 // pred_check
      _
    $region31: #{tpu_custom_call.1} parent=1 // pred_check_branch
      %400 = sbr.rel (0) target = $region33
    $region32: #{tpu_custom_call.1} parent=1 // pred_region
      %401 = dma.done [#allocation5], 16
    $region33: #{tpu_custom_call.1} parent=1 // pred_fallthru
      _
    %402 = vsyncpa [#allocation3], 1
    %403 = vsyncpa [#allocation5], 1

</llo_original>
